<compile_context>
chip_gen: v7x
topology: tpu7x:2x2x1
jax: 0.10.0
libtpu: 0.0.40
codegen_flags: <defaults>
</compile_context>

<pallas_src>
import jax
import jax.numpy as jnp
from jax.experimental import pallas as pl
from jax.experimental.pallas import tpu as pltpu


def _gate_mul_kernel(g_ref, x_ref, o_ref):
    # g_ref: (CT, 1) pre-sigmoided gate, resident across all grid steps.
    # x_ref / o_ref: (c_block, HW) feature block for this grid step.
    c_blk = x_ref.shape[0]
    start = pl.multiple_of(pl.program_id(0) * c_blk, 8)  # sublane-aligned offset
    gate = g_ref[pl.ds(start, c_blk), :]                  # (c_blk, 1)
    o_ref[...] = (gate * x_ref[...]).astype(o_ref.dtype)  # VPU, lane-broadcast


def _sublane_multiple(dtype) -> int:
    # Second-to-last block dim must be a multiple of this (packed sublanes).
    return {4: 8, 2: 16, 1: 32}.get(jnp.dtype(dtype).itemsize, 8)


def _pick_n_blocks(ct: int, dtype):
    """Per-generation channel-block count and whether to shard across TensorCores."""
    kind = ""
    try:
        kind = jax.devices()[0].device_kind.lower()
    except Exception:
        pass
    sub = _sublane_multiple(dtype)

    def fits(n):
        return ct % n == 0 and (ct // n) % sub == 0

    if "v7" in kind or "tpu7" in kind:
        # Two TensorCores: one block each. VMEM is nowhere near the limit; do not
        # shrink tiles further (each extra step costs ~0.35 us).
        if fits(2):
            return 2, True
        return 1, False
    if "v6" in kind:
        # Single TC, ~1.4 TB/s: roofline ~1 us, so per-step overhead dominates -> 1 block.
        return 1, False
    # v5e / megacore / unknown: 2 blocks to overlap read(i+1) with writeback(i).
    # TODO(synk): sweep n_blocks in {1, 2, 4, 8} with xprof min-of-N per generation.
    if fits(2):
        return 2, False
    return 1, False


@jax.jit
def sigmoid_mul(g_nchw, x_nchw):
    """out = sigmoid(g) * x, with g: (N, C, 1, 1), x: (N, C, H, W)."""
    N, C, H, W = x_nchw.shape
    assert g_nchw.shape == (N, C, 1, 1)

    CT, HW = N * C, H * W
    x2d = x_nchw.reshape(CT, HW)
    # Sigmoid hoisted to the wrapper: XLA fuses it into the preceding op; the kernel
    # then avoids EUP work on 1/128-lane-occupancy vregs.
    g2d = jax.nn.sigmoid(g_nchw).astype(x_nchw.dtype).reshape(CT, 1)

    n_blocks, core_parallel = _pick_n_blocks(CT, x_nchw.dtype)
    c_block = CT // n_blocks

    itemsize = jnp.dtype(x_nchw.dtype).itemsize
    cost = pl.CostEstimate(
        flops=CT * HW,                                   # one multiply per element
        transcendentals=0,                               # sigmoid lives in the wrapper
        bytes_accessed=(2 * CT * HW + CT) * itemsize,    # read x + write out + read gate
    )

    semantics = (pltpu.CORE_PARALLEL,) if core_parallel else ("parallel",)

    out2d = pl.pallas_call(
        _gate_mul_kernel,
        out_shape=jax.ShapeDtypeStruct((CT, HW), x_nchw.dtype),
        grid=(n_blocks,),
        in_specs=[
            pl.BlockSpec((CT, 1), lambda i: (0, 0)),        # gate: resident, DMA'd once
            pl.BlockSpec((c_block, HW), lambda i: (i, 0)),  # feature block
        ],
        out_specs=pl.BlockSpec((c_block, HW), lambda i: (i, 0)),
        cost_estimate=cost,
        compiler_params=pltpu.CompilerParams(dimension_semantics=semantics),
    )(g2d, x2d)

    return out2d.reshape(N, C, H, W)


if __name__ == "__main__":
    key = jax.random.PRNGKey(0)

    ok = True
    # (small smoke shape, the module's actual shape, and a bf16 variant)
    cases = [
        ((1, 32, 8, 8), jnp.float32),
        ((1, 960, 14, 14), jnp.float32),
        ((1, 960, 14, 14), jnp.bfloat16),
    ]
    for (N, C, H, W), dt in cases:
        k1, k2 = jax.random.split(jax.random.fold_in(key, C + jnp.dtype(dt).itemsize))
        g = jax.random.normal(k1, (N, C, 1, 1), dtype=jnp.float32).astype(dt)
        x = jax.random.normal(k2, (N, C, H, W), dtype=jnp.float32).astype(dt)

        ref = jax.nn.sigmoid(g.astype(jnp.float32)) * x.astype(jnp.float32)

        out = sigmoid_mul(g, x)
        jax.block_until_ready(out)

        assert out.shape == (N, C, H, W)
        tol = 1e-6 if dt == jnp.float32 else 2e-2
        ok &= bool(
            jnp.allclose(out.astype(jnp.float32), ref, atol=tol, rtol=tol)
        )

    assert ok
    print("KERNEL_OK")
</pallas_src>

<mosaic_0001>
module attributes {stable_mosaic.version = 11 : i64} {
  func.func @_gate_mul_kernel(%arg0: i32, %arg1: memref<32x1xf32, #tpu.memory_space<vmem>>, %arg2: memref<16x64xf32, #tpu.memory_space<vmem>>, %arg3: memref<16x64xf32, #tpu.memory_space<vmem>>) attributes {dimension_semantics = [#tpu.dimension_semantics<parallel>], iteration_bounds = array<i64: 2>, scalar_prefetch = 0 : i64, scratch_operands = 0 : i64, tpu.core_type = #tpu.core_type<tc>, window_params = [{pipeline_mode = #tpu.pipeline_mode<synchronous>, transform_indices = @transform_0, window_bounds = array<i64: 32, 1>}, {transform_indices = @transform_1, window_bounds = array<i64: 16, 64>}, {transform_indices = @transform_2, window_bounds = array<i64: 16, 64>}]} {
    %c16_i32 = arith.constant 16 : i32
    %0 = arith.muli %arg0, %c16_i32 : i32
    %1 = tpu.assume_multiple %0, 8 : i32
    %2 = arith.index_cast %1 : i32 to index
    %c0 = arith.constant 0 : index
    %3 = vector.load %arg1[%2, %c0] : memref<32x1xf32, #tpu.memory_space<vmem>>, vector<16x1xf32>
    %c0_0 = arith.constant 0 : index
    %c0_1 = arith.constant 0 : index
    %4 = vector.load %arg2[%c0_0, %c0_1] : memref<16x64xf32, #tpu.memory_space<vmem>>, vector<16x64xf32>
    %5 = vector.broadcast %3 : vector<16x1xf32> to vector<16x64xf32>
    %6 = arith.mulf %5, %4 : vector<16x64xf32>
    %c0_2 = arith.constant 0 : index
    %c0_3 = arith.constant 0 : index
    %7 = vector.load %arg3[%c0_2, %c0_3] : memref<16x64xf32, #tpu.memory_space<vmem>>, vector<16x64xf32>
    tpu.vector_store %arg3[%c0_2, %c0_3], %6 {strides = array<i32>} : memref<16x64xf32, #tpu.memory_space<vmem>>, vector<16x64xf32>,
    return
  }
  func.func @transform_0(%arg0: i32) -> (i32, i32) {
    %c0_i32 = arith.constant 0 : i32
    %c0_i32_0 = arith.constant 0 : i32
    %c0_i32_1 = arith.constant 0 : i32
    return %c0_i32, %c0_i32_0 : i32, i32
  }
  func.func @transform_1(%arg0: i32) -> (i32, i32) {
    %c0_i32 = arith.constant 0 : i32
    %c0_i32_0 = arith.constant 0 : i32
    return %arg0, %c0_i32 : i32, i32
  }
  func.func @transform_2(%arg0: i32) -> (i32, i32) {
    %c0_i32 = arith.constant 0 : i32
    %c0_i32_0 = arith.constant 0 : i32
    return %arg0, %c0_i32 : i32, i32
  }
}

</mosaic_0001>

<llo_original>
// kernel: sigmoid_mul.1
$region0: #{sigmoid_mul.1}
  #allocation0 [shape = 'u32[]', space=smem, size = 0x4, offset = 0x4, fixed_abs, tag = 'smem constant byte address 0x4 - core index']
  #allocation1 [shape = 'u32[144,128]{1,0:T(1,128)}', space=vmem, size = 0x12000, scoped, tag = 'internal scratch']
  %s0 = inlined_call_operand.vmem [shape: f32[32,1], index: 0, kind: input, shape index: {}]
  %s1 = inlined_call_operand.vmem [shape: f32[32,64], index: 1, kind: input, shape index: {}]
  %s2 = inlined_call_operand.vmem [shape: f32[32,64], index: 2, kind: output, shape index: {}]
  %s3 = sld [smem:[#allocation0]]
  $region41: #{sigmoid_mul.1} parent=0
    _
  %s5 = ssub.s32 1, %s3
  %s6 = scalar_select 0, %s5, %s3
  loop: start=0, step=1, limit=4
  $region2: #{sigmoid_mul.1} parent=0 // loop_pre_header
    _
  $region3: #{sigmoid_mul.1} parent=0 // loop_header
    %s8 = sphi 0, %s12
    %p9 = scmp.ge.s32.totalorder %s8, 4
    %s16 = sphi 0, %s16
    %s18 = sphi 0, %s16
    %s19 = sphi 0, %s18
    %s33 = sphi 0, %s19
    %s39 = sphi 0, %s41
    %s42 = sphi 0, %s39
    %s43 = sphi 0, %s42
    %s59 = sphi 0, %s43
    %s65 = sphi 0, %s67
    %s68 = sphi 0, %s65
    %s69 = sphi 0, %s68
    %s85 = sphi 0, %s69
  $region4: #{sigmoid_mul.1} parent=0 // loop_header_branch
    %11 = sbr.rel (%p9) target = $region8
  $region5: #{sigmoid_mul.1} parent=0 // loop_body
    %s13 = ssub.s32 %s8, 1
    %s14 = ssub.s32 %s8, 2
    %s15 = sadd.s32 %s8, 1
    %s17 = sadd.s32 %s16, 1
    %p20 = scmp.eq.s32.totalorder %s8, 1
    %p21 = scmp.ne.s32.totalorder %s16, %s18
    %p22 = scmp.eq.s32.totalorder %s8, 0
    %p23 = por %p21, %p22
    %p24 = scmp.ne.s32.totalorder %s16, %s18
    %p25 = scmp.eq.s32.totalorder %s13, 1
    %p26 = por %p24, %p25
    %p27 = scmp.ne.s32.totalorder %s18, %s19
    %p28 = scmp.eq.s32.totalorder %s13, 0
    %p29 = por %p27, %p28
    %p30 = scmp.ne.s32.totalorder %s18, %s19
    %p31 = scmp.eq.s32.totalorder %s14, 1
    %p32 = por %p30, %p31
    %p34 = scmp.ne.s32.totalorder %s19, %s33
    %p35 = scmp.eq.s32.totalorder %s14, 0
    %p36 = por %p34, %p35
    %s37 = ssub.s32 %s8, %s15
    %p38 = scmp.eq.s32.totalorder %s37, 0
    %s40 = sadd.s32 %s39, 1
    %s41 = scalar_select %p38, %s39, %s40
    %p44 = pneg %p38
    %p45 = scmp.eq.s32.totalorder %s8, 1
    %p46 = por %p44, %p45
    %p47 = scmp.ne.s32.totalorder %s39, %s42
    %p48 = scmp.eq.s32.totalorder %s8, 0
    %p49 = por %p47, %p48
    %p50 = scmp.ne.s32.totalorder %s39, %s42
    %p51 = scmp.eq.s32.totalorder %s13, 1
    %p52 = por %p50, %p51
    %p53 = scmp.ne.s32.totalorder %s42, %s43
    %p54 = scmp.eq.s32.totalorder %s13, 0
    %p55 = por %p53, %p54
    %p56 = scmp.ne.s32.totalorder %s42, %s43
    %p57 = scmp.eq.s32.totalorder %s14, 1
    %p58 = por %p56, %p57
    %p60 = scmp.ne.s32.totalorder %s43, %s59
    %p61 = scmp.eq.s32.totalorder %s14, 0
    %p62 = por %p60, %p61
    %s63 = ssub.s32 %s8, %s15
    %p64 = scmp.eq.s32.totalorder %s63, 0
    %s66 = sadd.s32 %s65, 1
    %s67 = scalar_select %p64, %s65, %s66
    %p70 = pneg %p64
    %p71 = scmp.eq.s32.totalorder %s8, 1
    %p72 = por %p70, %p71
    %p73 = scmp.ne.s32.totalorder %s65, %s68
    %p74 = scmp.eq.s32.totalorder %s8, 0
    %p75 = por %p73, %p74
    %p76 = scmp.ne.s32.totalorder %s65, %s68
    %p77 = scmp.eq.s32.totalorder %s13, 1
    %p78 = por %p76, %p77
    %p79 = scmp.ne.s32.totalorder %s68, %s69
    %p80 = scmp.eq.s32.totalorder %s13, 0
    %p81 = por %p79, %p80
    %p82 = scmp.ne.s32.totalorder %s68, %s69
    %p83 = scmp.eq.s32.totalorder %s14, 1
    %p84 = por %p82, %p83
    %p86 = scmp.ne.s32.totalorder %s69, %s85
    %p87 = scmp.eq.s32.totalorder %s14, 0
    %p88 = por %p86, %p87
    %p89 = scmp.le.s32.totalorder 1, %s8
    %p90 = scmp.lt.s32.totalorder %s8, 3
    %p91 = pnand %p89, %p90
    %p92 = pneg %p91
    // Predicated region
    $region9: #{sigmoid_mul.1} parent=5 // pred_check
      _
    $region10: #{sigmoid_mul.1} parent=5 // pred_check_branch
      %94 = sbr.rel (%p91) target = $region12
    $region11: #{sigmoid_mul.1} parent=5 // pred_region
      %s95 = ssub.s32 %s8, 1
      // Predicated region
      $region13: #{sigmoid_mul.1} parent=11 // pred_check
        %p96 = pneg %p29
      $region14: #{sigmoid_mul.1} parent=11 // pred_check_branch
        %98 = sbr.rel (%p96) target = $region16
      $region15: #{sigmoid_mul.1} parent=11 // pred_region
        _
      $region16: #{sigmoid_mul.1} parent=11 // pred_fallthru
        _
    $region12: #{sigmoid_mul.1} parent=5 // pred_fallthru
      _
    %p99 = scmp.lt.s32.totalorder %s8, 2
    // Predicated region
    $region17: #{sigmoid_mul.1} parent=5 // pred_check
      %p100 = pneg %p99
    $region18: #{sigmoid_mul.1} parent=5 // pred_check_branch
      %102 = sbr.rel (%p100) target = $region20
    $region19: #{sigmoid_mul.1} parent=5 // pred_region
      // Predicated region
      $region21: #{sigmoid_mul.1} parent=19 // pred_check
        %p103 = pneg %p49
      $region22: #{sigmoid_mul.1} parent=19 // pred_check_branch
        %105 = sbr.rel (%p103) target = $region24
      $region23: #{sigmoid_mul.1} parent=19 // pred_region
        %s106 = smul.u32 2, %s8
        %p107 = scmp.lt.s32.totalorder %s106, 3
        %s108 = scalar_select %p107, %s106, 3
        %s109 = smul.addr %s108, 8
        %s110 = scalar_lea.vmem %s1, %s109
        %s111 = smul.u32 2, %s8
      $region24: #{sigmoid_mul.1} parent=19 // pred_fallthru
        _
    $region20: #{sigmoid_mul.1} parent=5 // pred_fallthru
      _
    %p112 = scmp.le.s32.totalorder 1, %s8
    %p113 = scmp.lt.s32.totalorder %s8, 3
    %p114 = pnand %p112, %p113
    %p115 = pneg %p114
    // Predicated region
    $region25: #{sigmoid_mul.1} parent=5 // pred_check
      _
    $region26: #{sigmoid_mul.1} parent=5 // pred_check_branch
      %117 = sbr.rel (%p114) target = $region28
    $region27: #{sigmoid_mul.1} parent=5 // pred_region
      %s118 = ssub.s32 %s8, 1
      %p119 = pneg %p29
      %p120 = pneg %p26
      %s121 = smul.u32 2, %s13
      %p122 = scmp.lt.s32.totalorder %s121, 3
      %s123 = scalar_select %p122, %s121, 3
      %s124 = smul.addr %s123, 8
      %s125 = scalar_lea.vmem %s1, %s124
      %p126 = pneg %p55
      %p127 = pneg %p52
      %p128 = pneg %p81
      %p129 = pneg %p78
      %s130 = smul.u32 2, %s13
      %p131 = scmp.lt.s32.totalorder %s130, 3
      %s132 = scalar_select %p131, %s130, 3
      %s133 = smul.addr %s132, 8
      %s134 = scalar_lea.vmem %s2, %s133
      %s135 = smul.u32 2, %s13
      %p136 = scmp.lt.s32.totalorder %s135, 3
      %s137 = scalar_select %p136, %s135, 3
      %s138 = smul.addr %s137, 8
      %s139 = scalar_lea.vmem %s1, %s138
      %s140 = smul.u32 2, %s13
      %s141 = smul.u32 2, %s13
      %p142 = scmp.lt.s32.totalorder %s141, 3
      %s143 = scalar_select %p142, %s141, 3
      %s144 = smul.addr %s143, 8
      %s145 = scalar_lea.vmem %s2, %s144
      %s146 = smul.u32 2, %s13
      %s147 = smul.u32 %s13, 16
      %s148 = scalar_lea.vmem %s0, %s147
      %v149 = vld [vmem:[%s148] sm:$0xff]
      %v150 = vld [vmem:[%s148 + $0x8] sm:$0xff]
      %v151 = vld [vmem:[%s139] sm:$0xff]
      %v152 = vld [vmem:[%s139 + $0x8] sm:$0xff]
      %154 = vset.pattern.permute.xlu0 0
      %155 = vperm.xlu0 %154, %v149
      %v156 = vpop.permute.xlu0 %155
      %159 = vset.pattern.permute.xlu0 0
      %160 = vperm.xlu0 %159, %v150
      %v161 = vpop.permute.xlu0 %160
      %v163 = vmul.f32 %v156, %v151
      %v164 = vmul.f32 %v161, %v152
      %vm165 = vcmask 523264
      %166 = vst.msk [vmem:[%s145] sm:$0xff] %vm165, %v163
      %167 = vst.msk [vmem:[%s145 + $0x8] sm:$0xff] %vm165, %v164
      %s168 = smul.u32 2, %s13
      %p169 = scmp.lt.s32.totalorder %s168, 3
      %s170 = scalar_select %p169, %s168, 3
      %s171 = smul.addr %s170, 8
      %s172 = scalar_lea.vmem %s2, %s171
      // Predicated region
      $region29: #{sigmoid_mul.1} parent=27 // pred_check
        %p173 = pneg %p78
      $region30: #{sigmoid_mul.1} parent=27 // pred_check_branch
        %175 = sbr.rel (%p173) target = $region32
      $region31: #{sigmoid_mul.1} parent=27 // pred_region
        %s176 = smul.u32 2, %s13
      $region32: #{sigmoid_mul.1} parent=27 // pred_fallthru
        _
    $region28: #{sigmoid_mul.1} parent=5 // pred_fallthru
      _
    %p177 = scmp.le.s32.totalorder 2, %s8
    // Predicated region
    $region33: #{sigmoid_mul.1} parent=5 // pred_check
      %p178 = pneg %p177
    $region34: #{sigmoid_mul.1} parent=5 // pred_check_branch
      %180 = sbr.rel (%p178) target = $region36
    $region35: #{sigmoid_mul.1} parent=5 // pred_region
      %s181 = ssub.s32 %s8, 2
      // Predicated region
      $region37: #{sigmoid_mul.1} parent=35 // pred_check
        %p182 = pneg %p84
      $region38: #{sigmoid_mul.1} parent=35 // pred_check_branch
        %184 = sbr.rel (%p182) target = $region40
      $region39: #{sigmoid_mul.1} parent=35 // pred_region
        %s185 = smul.u32 2, %s14
        %p186 = scmp.lt.s32.totalorder %s185, 3
        %s187 = scalar_select %p186, %s185, 3
        %s188 = smul.addr %s187, 8
        %s189 = scalar_lea.vmem %s2, %s188
      $region40: #{sigmoid_mul.1} parent=35 // pred_fallthru
        _
    $region36: #{sigmoid_mul.1} parent=5 // pred_fallthru
      _
  $region6: #{sigmoid_mul.1} parent=0 // loop_footer
    %s12 = sadd.s32 1, %s8
  $region7: #{sigmoid_mul.1} parent=0 // loop_footer_branch
    %7 = sbr.rel target = $region3
  $region8: #{sigmoid_mul.1} parent=0 // loop_exit
    _

</llo_original>
